<compile_context>
chip_gen: v7x
topology: tpu7x:2x2x1
jax: 0.10.0
libtpu: 0.0.40
codegen_flags: <defaults>
</compile_context>

<pallas_src>
import functools

import jax
import jax.numpy as jnp
from jax import lax
from jax.experimental import pallas as pl
from jax.experimental.pallas import tpu as pltpu

_LANE = 128
_SUBLANE = 8
_MAX_TILE_ROWS = 1024  # (1024, 128) f32 block = 512 KiB per input per buffer


def _rmse_kernel(yhat_ref, y_ref, out_ref, acc_ref, *,
                 n_elems, rows_valid, tile_rows, eps, needs_row_mask):
    i = pl.program_id(0)

    @pl.when(i == 0)
    def _():
        acc_ref[...] = jnp.zeros_like(acc_ref)

    # Upcast on the VPU (required anyway on v5e for bf16 inputs).
    d = yhat_ref[...].astype(jnp.float32) - y_ref[...].astype(jnp.float32)
    sq = d * d

    if needs_row_mask:
        # Ragged tail: rows past `rows_valid` are out-of-bounds garbage in the
        # last block; zero them before accumulating. (Non-tail blocks are
        # fully valid, so the select is a no-op there; cheap VPU filler.)
        row = lax.broadcasted_iota(jnp.int32, sq.shape, 0) + i * tile_rows
        sq = jnp.where(row < rows_valid, sq, jnp.float32(0.0))

    # VPU-only partial reduction into an (8, 128) vector accumulator.
    acc_ref[...] += sq.reshape(tile_rows // _SUBLANE, _SUBLANE, _LANE).sum(axis=0)

    @pl.when(i == pl.num_programs(0) - 1)
    def _():
        # Single XLU reduce + EUP sqrt in the epilogue only.
        mse = jnp.sum(acc_ref[...]) / jnp.float32(n_elems)
        out_ref[0, 0] = jnp.sqrt(mse + jnp.float32(eps))


def rmse_loss(yhat, y, eps=1e-08):
    assert yhat.shape == y.shape, "yhat and y must have the same shape"
    n_elems = int(yhat.size)
    assert n_elems > 0, "empty input"

    # Keep native dtype: no extra HBM pass for an astype in the wrapper.
    yhat_flat = jnp.ravel(yhat)
    y_flat = jnp.ravel(y)

    # Only pad to the 128-lane width when needed for the free 2-D reshape.
    # Padded positions are zero in BOTH arrays, so their diff is 0 and they
    # contribute nothing to the sum of squares; mean divides by the true N.
    rem = n_elems % _LANE
    if rem:
        pad = _LANE - rem
        yhat_flat = jnp.pad(yhat_flat, (0, pad))
        y_flat = jnp.pad(y_flat, (0, pad))

    rows = yhat_flat.shape[0] // _LANE
    yhat2d = yhat_flat.reshape(rows, _LANE)
    y2d = y_flat.reshape(rows, _LANE)

    # Large tile (amortizes ~0.35 us/step overhead), rounded up to the sublane
    # multiple of 8; ragged tail handled by in-kernel masking, not padding.
    tile_rows = min(_MAX_TILE_ROWS, ((rows + _SUBLANE - 1) // _SUBLANE) * _SUBLANE)
    grid = (pl.cdiv(rows, tile_rows),)
    needs_row_mask = (rows % tile_rows) != 0

    kernel = functools.partial(
        _rmse_kernel,
        n_elems=n_elems,
        rows_valid=rows,
        tile_rows=tile_rows,
        eps=float(eps),
        needs_row_mask=needs_row_mask,
    )

    bytes_in = n_elems * (yhat.dtype.itemsize + y.dtype.itemsize)
    cost = pl.CostEstimate(
        flops=3 * n_elems,          # sub, mul, add per element
        transcendentals=1,          # final sqrt
        bytes_accessed=bytes_in + 4,
    )

    out = pl.pallas_call(
        kernel,
        out_shape=jax.ShapeDtypeStruct((1, 1), jnp.float32),
        grid_spec=pltpu.PrefetchScalarGridSpec(
            num_scalar_prefetch=0,
            grid=grid,
            in_specs=[
                pl.BlockSpec((tile_rows, _LANE), lambda i: (i, 0)),
                pl.BlockSpec((tile_rows, _LANE), lambda i: (i, 0)),
            ],
            out_specs=pl.BlockSpec(
                (1, 1), lambda i: (0, 0), memory_space=pltpu.SMEM
            ),
            scratch_shapes=[pltpu.VMEM((_SUBLANE, _LANE), jnp.float32)],
        ),
        compiler_params=pltpu.CompilerParams(
            dimension_semantics=("arbitrary",)
        ),
        cost_estimate=cost,
    )(yhat2d, y2d)

    return out[0, 0]


def _check(shape, dtype, key, eps=1e-08, rtol=2e-5, atol=1e-6):
    k1, k2 = jax.random.split(key)
    yhat = jax.random.normal(k1, shape, dtype=dtype)
    y = jax.random.normal(k2, shape, dtype=dtype)
    loss = rmse_loss(yhat, y, eps=eps)
    jax.block_until_ready(loss)
    ref = jnp.sqrt(
        jnp.mean((yhat.astype(jnp.float32) - y.astype(jnp.float32)) ** 2) + eps
    )
    assert jnp.allclose(loss, ref, rtol=rtol, atol=atol), (shape, loss, ref)


if __name__ == "__main__":
    key = jax.random.PRNGKey(0)
    keys = jax.random.split(key, 3)

    # Primary small case consistent with an MF-style use: predicted vs
    # ground-truth ratings tensor, (2, 4, 16, 16) = 2048 elements.
    _check((2, 4, 16, 16), jnp.float32, keys[0])

    # Odd size: exercises the lane pad + ragged-row mask path.
    _check((3, 5, 7), jnp.float32, keys[1])

    # Multi-grid-step case with a ragged tail block (2008 rows, tile=1024).
    _check((257, 1000), jnp.float32, keys[2])

    print("KERNEL_OK")
</pallas_src>

<mosaic_0001>
module attributes {stable_mosaic.version = 11 : i64} {
  func.func @_rmse_kernel(%arg0: i32, %arg1: memref<16x128xf32, #tpu.memory_space<vmem>>, %arg2: memref<16x128xf32, #tpu.memory_space<vmem>>, %arg3: memref<1x1xf32, #tpu.memory_space<smem>>, %arg4: memref<8x128xf32, #tpu.memory_space<vmem>>) attributes {dimension_semantics = [#tpu.dimension_semantics<arbitrary>], iteration_bounds = array<i64: 1>, scalar_prefetch = 0 : i64, scratch_operands = 1 : i64, tpu.core_type = #tpu.core_type<tc>, window_params = [{transform_indices = @transform_0, window_bounds = array<i64: 16, 128>}, {transform_indices = @transform_1, window_bounds = array<i64: 16, 128>}, {transform_indices = @transform_2, window_bounds = array<i64: 1, 1>}]} {
    %c0_i32 = arith.constant 0 : i32
    %0 = arith.cmpi eq, %arg0, %c0_i32 : i32
    %1 = arith.extui %0 : i1 to i32
    %c0_i32_0 = arith.constant 0 : i32
    %2 = arith.cmpi ne, %1, %c0_i32_0 : i32
    scf.if %2 {
      %cst_10 = arith.constant 0.000000e+00 : f32
      %15 = vector.broadcast %cst_10 : f32 to vector<8x128xf32>
      %c0_11 = arith.constant 0 : index
      %c0_12 = arith.constant 0 : index
      %16 = vector.load %arg4[%c0_11, %c0_12] : memref<8x128xf32, #tpu.memory_space<vmem>>, vector<8x128xf32>
      tpu.vector_store %arg4[%c0_11, %c0_12], %15 {strides = array<i32>} : memref<8x128xf32, #tpu.memory_space<vmem>>, vector<8x128xf32>,
    } else {
    }
    %c0 = arith.constant 0 : index
    %c0_1 = arith.constant 0 : index
    %3 = vector.load %arg1[%c0, %c0_1] : memref<16x128xf32, #tpu.memory_space<vmem>>, vector<16x128xf32>
    %c0_2 = arith.constant 0 : index
    %c0_3 = arith.constant 0 : index
    %4 = vector.load %arg2[%c0_2, %c0_3] : memref<16x128xf32, #tpu.memory_space<vmem>>, vector<16x128xf32>
    %5 = arith.subf %3, %4 : vector<16x128xf32>
    %6 = arith.mulf %5, %5 : vector<16x128xf32>
    %c0_4 = arith.constant 0 : index
    %c0_5 = arith.constant 0 : index
    %7 = vector.load %arg4[%c0_4, %c0_5] : memref<8x128xf32, #tpu.memory_space<vmem>>, vector<8x128xf32>
    %8 = vector.shape_cast %6 : vector<16x128xf32> to vector<2x8x128xf32>
    %cst = arith.constant dense<0.000000e+00> : vector<8x128xf32>
    %9 = vector.multi_reduction <add>, %8, %cst [0] : vector<2x8x128xf32> to vector<8x128xf32>
    %10 = arith.addf %7, %9 : vector<8x128xf32>
    %c0_6 = arith.constant 0 : index
    %c0_7 = arith.constant 0 : index
    %11 = vector.load %arg4[%c0_6, %c0_7] : memref<8x128xf32, #tpu.memory_space<vmem>>, vector<8x128xf32>
    tpu.vector_store %arg4[%c0_6, %c0_7], %10 {strides = array<i32>} : memref<8x128xf32, #tpu.memory_space<vmem>>, vector<8x128xf32>,
    %c0_i32_8 = arith.constant 0 : i32
    %12 = arith.cmpi eq, %arg0, %c0_i32_8 : i32
    %13 = arith.extui %12 : i1 to i32
    %c0_i32_9 = arith.constant 0 : i32
    %14 = arith.cmpi ne, %13, %c0_i32_9 : i32
    scf.if %14 {
      %c0_10 = arith.constant 0 : index
      %c0_11 = arith.constant 0 : index
      %15 = vector.load %arg4[%c0_10, %c0_11] : memref<8x128xf32, #tpu.memory_space<vmem>>, vector<8x128xf32>
      %16 = vector.shape_cast %15 : vector<8x128xf32> to vector<1x8x128xf32>
      %cst_12 = arith.constant dense<0.000000e+00> : vector<1xf32>
      %17 = vector.multi_reduction <add>, %16, %cst_12 [1, 2] : vector<1x8x128xf32> to vector<1xf32>
      %18 = vector.shape_cast %17 : vector<1xf32> to vector<1x1x1xf32>
      %19 = vector.extract %18[0, 0, 0] : f32 from vector<1x1x1xf32>
      %cst_13 = arith.constant 2.048000e+03 : f32
      %20 = arith.divf %19, %cst_13 : f32
      %cst_14 = arith.constant 9.99999993E-9 : f32
      %21 = arith.addf %20, %cst_14 : f32
      %22 = math.sqrt %21 : f32
      %c0_15 = arith.constant 0 : index
      %c0_16 = arith.constant 0 : index
      %23 = memref.load %arg3[%c0_15, %c0_16] : memref<1x1xf32, #tpu.memory_space<smem>>
      memref.store %22, %arg3[%c0_15, %c0_16] : memref<1x1xf32, #tpu.memory_space<smem>>
    } else {
    }
    return
  }
  func.func @transform_0(%arg0: i32) -> (i32, i32) {
    %c0_i32 = arith.constant 0 : i32
    %c0_i32_0 = arith.constant 0 : i32
    return %arg0, %c0_i32 : i32, i32
  }
  func.func @transform_1(%arg0: i32) -> (i32, i32) {
    %c0_i32 = arith.constant 0 : i32
    %c0_i32_0 = arith.constant 0 : i32
    return %arg0, %c0_i32 : i32, i32
  }
  func.func @transform_2(%arg0: i32) -> (i32, i32) {
    %c0_i32 = arith.constant 0 : i32
    %c0_i32_0 = arith.constant 0 : i32
    %c0_i32_1 = arith.constant 0 : i32
    return %c0_i32, %c0_i32_0 : i32, i32
  }
}

</mosaic_0001>

<llo_original>
// kernel: tpu_custom_call.1
$region0: #{tpu_custom_call.1}
  #allocation0 [shape = 'u32[]', space=smem, size = 0x4, offset = 0x4, fixed_abs, tag = 'smem constant byte address 0x4 - core index']
  #allocation1 [shape = 'u32[144,128]{1,0:T(1,128)}', space=vmem, size = 0x12000, scoped, tag = 'internal scratch']
  #allocation2 [shape = 'f32[8,128]{1,0:T(8,128)}', space=vmem, size = 0x1000, scoped, tag = 'scratch operand']
  %s0 = inlined_call_operand.hbm [shape: f32[16,128], index: 0, kind: input, shape index: {}]
  %s1 = inlined_call_operand.hbm [shape: f32[16,128], index: 1, kind: input, shape index: {}]
  %s2 = inlined_call_operand.hbm [shape: f32[1,1], index: 2, kind: output, shape index: {}]
  %s3 = sld [smem:[#allocation0]]
  $region34: #{tpu_custom_call.1} parent=0
    _
  %s5 = ssub.s32 1, %s3
  %s6 = scalar_select 0, %s5, %s3
  $region1: #{tpu_custom_call.1} parent=0
    #allocation3 [shape = 'u8[8192]{0}', space=vmem, size = 0x2000, scoped, tag = 'input window, operand 0, single buffered']
    #allocation4 [shape = 's32[1]{0}', space=sflag, size = 0x4, scoped, tag = 'scoped memory for tpu_custom_call.1']
    #allocation5 [shape = 's32[1]{0}', space=sflag, size = 0x4, scoped, tag = 'scoped memory for tpu_custom_call.1']
    #allocation6 [shape = 'u8[8192]{0}', space=vmem, size = 0x2000, scoped, tag = 'input window, operand 1, single buffered']
    #allocation7 [shape = 's32[1]{0}', space=sflag, size = 0x4, scoped, tag = 'scoped memory for tpu_custom_call.1']
    #allocation8 [shape = 'u8[512]{0}', space=smem, size = 0x200, scoped, tag = 'output window, operand 0, single buffered']
    %7 = vsyncpa [#allocation4], 0
    %8 = vsyncpa [#allocation7], 0
    %9 = vsyncpa [#allocation5], 0
    // Predicated region
    $region2: #{tpu_custom_call.1} parent=1 // pred_check
      _
    $region3: #{tpu_custom_call.1} parent=1 // pred_check_branch
      %11 = sbr.rel (0) target = $region5
    $region4: #{tpu_custom_call.1} parent=1 // pred_region
      %s13 = ssub.s32 256, 256
      %14 = vsyncadd [#allocation4], %s13
      %s15 = sshll.u32 [#allocation3], 4
      %s16 = int_to_ptr.vmem [resolvable:$true] %s15
      %21 = dma.hbm_to_vmem [thread:$0]  %s0, 256, %s16, [#allocation4], 128, 128, 8
    $region5: #{tpu_custom_call.1} parent=1 // pred_fallthru
      _
    // Predicated region
    $region6: #{tpu_custom_call.1} parent=1 // pred_check
      _
    $region7: #{tpu_custom_call.1} parent=1 // pred_check_branch
      %23 = sbr.rel (0) target = $region9
    $region8: #{tpu_custom_call.1} parent=1 // pred_region
      %s25 = ssub.s32 256, 256
      %26 = vsyncadd [#allocation7], %s25
      %s27 = sshll.u32 [#allocation6], 4
      %s28 = int_to_ptr.vmem [resolvable:$true] %s27
      %33 = dma.hbm_to_vmem [thread:$0]  %s1, 256, %s28, [#allocation7], 128, 128, 8
    $region9: #{tpu_custom_call.1} parent=1 // pred_fallthru
      _
    // Predicated region
    $region10: #{tpu_custom_call.1} parent=1 // pred_check
      _
    $region11: #{tpu_custom_call.1} parent=1 // pred_check_branch
      %35 = sbr.rel (0) target = $region13
    $region12: #{tpu_custom_call.1} parent=1 // pred_region
      %36 = dma.done [#allocation4], 256
    $region13: #{tpu_custom_call.1} parent=1 // pred_fallthru
      _
    // Predicated region
    $region14: #{tpu_custom_call.1} parent=1 // pred_check
      _
    $region15: #{tpu_custom_call.1} parent=1 // pred_check_branch
      %38 = sbr.rel (0) target = $region17
    $region16: #{tpu_custom_call.1} parent=1 // pred_region
      %39 = dma.done [#allocation7], 256
    $region17: #{tpu_custom_call.1} parent=1 // pred_fallthru
      _
    %p40 = scmp.eq.s32.totalorder 0, 0
    // Predicated region
    $region18: #{tpu_custom_call.1} parent=1 // pred_check
      %p41 = pneg %p40
    $region19: #{tpu_custom_call.1} parent=1 // pred_check_branch
      %43 = sbr.rel (%p41) target = $region21
    $region20: #{tpu_custom_call.1} parent=1 // pred_region
      %44 = vst [vmem:[#allocation2] sm:$0xff] 0.0
    $region21: #{tpu_custom_call.1} parent=1 // pred_fallthru
      _
    %v45 = vld [vmem:[#allocation3] sm:$0xff]
    %v46 = vld [vmem:[#allocation3 + $0x8] sm:$0xff]
    %v47 = vld [vmem:[#allocation6] sm:$0xff]
    %v48 = vld [vmem:[#allocation6 + $0x8] sm:$0xff]
    %v49 = vsub.f32 %v45, %v47
    %v50 = vsub.f32 %v46, %v48
    %v51 = vmul.f32 %v49, %v49
    %v52 = vmul.f32 %v50, %v50
    %v53 = vld [vmem:[#allocation2] sm:$0xff]
    %v54 = vadd.f32 %v51, %v52
    %v55 = vadd.f32 %v53, %v54
    %56 = vst [vmem:[#allocation2] sm:$0xff] %v55
    // Predicated region
    $region22: #{tpu_custom_call.1} parent=1 // pred_check
      %p57 = pneg %p40
    $region23: #{tpu_custom_call.1} parent=1 // pred_check_branch
      %59 = sbr.rel (%p57) target = $region25
    $region24: #{tpu_custom_call.1} parent=1 // pred_region
      %v60 = vld [vmem:[#allocation2] sm:$0xff]
      %61 = vadd.xlane.f32.xlu0 %v60
      %v62 = vpop.xlane.xlu0 %61
      %v63 = vrot.slane %v62, 4
      %v64 = vadd.f32 %v62, %v63
      %v65 = vrot.slane %v64, 2
      %v66 = vadd.f32 %v64, %v65
      %v67 = vrot.slane %v66, 1
      %v68 = vadd.f32 %v66, %v67
      %s69 = vtos %v68
      %v70 = vrcp.pop 2048.0
      %s71 = vtos %v70
      %s72 = smul.f32 %s69, %s71
      %s73 = sadd.f32 %s72, 1e-08
      %v74 = vstv %s73
      %v75 = vrsqrt.pop %v74
      %v76 = vmul.f32 %v74, %v75
      %vm77 = vcmp.eq.f32.partialorder %v74, inf
      %v78 = vsel %vm77, %v74, %v76
      %vm79 = vcmp.eq.f32.partialorder %v74, 0.0
      %v80 = vand.u32 %v74, 2147483648
      %v81 = vsel %vm79, %v80, %v78
      %s82 = vtos %v81
      %s83 = scalar_lea.smem [#allocation8], 0
      %84 = sst [smem:[%s83]] %s82
    $region25: #{tpu_custom_call.1} parent=1 // pred_fallthru
      _
    // Predicated region
    $region26: #{tpu_custom_call.1} parent=1 // pred_check
      _
    $region27: #{tpu_custom_call.1} parent=1 // pred_check_branch
      %86 = sbr.rel (0) target = $region29
    $region28: #{tpu_custom_call.1} parent=1 // pred_region
      %s88 = ssub.s32 16, 16
      %89 = vsyncadd [#allocation5], %s88
      %92 = dma.smem_to_hbm [#allocation8], 16, %s2, [#allocation5]
    $region29: #{tpu_custom_call.1} parent=1 // pred_fallthru
      _
    // Predicated region
    $region30: #{tpu_custom_call.1} parent=1 // pred_check
      _
    $region31: #{tpu_custom_call.1} parent=1 // pred_check_branch
      %94 = sbr.rel (0) target = $region33
    $region32: #{tpu_custom_call.1} parent=1 // pred_region
      %95 = dma.done [#allocation5], 16
    $region33: #{tpu_custom_call.1} parent=1 // pred_fallthru
      _
    %96 = sfence
    %97 = vsyncpa [#allocation4], 1
    %98 = vsyncpa [#allocation7], 1
    %99 = vsyncpa [#allocation5], 1

</llo_original>
